<compile_context>
chip_gen: v6e
topology: v6e:2x2x1
jax: 0.10.0
libtpu: 0.0.40
codegen_flags: <defaults>
</compile_context>

<pallas_src>
import functools
import math

import jax
import jax.numpy as jnp
from jax.experimental import pallas as pl
from jax.experimental.pallas import tpu as pltpu


def _fused_attn_kernel(x_ref, w_ref, b_ref, o_ref, *,
                       batches_per_block, seq_len, d_pad, compute_dtype,
                       approx_recip):
    """One grid step: `batches_per_block` whole batch elements.

    x_ref: (Mb, D_in)      Mb = batches_per_block * seq_len
    w_ref: (D_in, 3*Dp)    fused [Wq*scale | Wk | Wv], pre-transposed, padded,
                           already in compute_dtype (no in-kernel cast)
    b_ref: (1, 3*Dp)       fused [bq*scale | bk | bv] in f32
    o_ref: (Mb, Dp)        lane-dense output slab
    """
    mb = batches_per_block * seq_len

    x = x_ref[...].astype(compute_dtype)         # (Mb, D_in)
    w = w_ref[...]                                # (D_in, 3*Dp), pre-cast host-side
    b = b_ref[...]                                # (1, 3*Dp) f32

    # Fused Q/K/V projection: one MXU matmul, f32 accumulation, f32 bias add.
    qkv = jnp.dot(x, w, preferred_element_type=jnp.float32) + b   # (Mb, 3*Dp)

    # 128-aligned lane slices, then split rows back into (Bb, S, Dp).
    # (Bb>1 only when S%8==0, so the reshape stays on vreg-tile boundaries.)
    q = qkv[:, 0 * d_pad:1 * d_pad].reshape(batches_per_block, seq_len, d_pad)
    k = qkv[:, 1 * d_pad:2 * d_pad].reshape(batches_per_block, seq_len, d_pad)
    v = qkv[:, 2 * d_pad:3 * d_pad].reshape(batches_per_block, seq_len, d_pad)

    # Scores: contraction over the last axes (no XLU transpose). The softmax
    # scale is already folded into the Q weights/bias; padded lanes of q/k are
    # exactly zero so they do not perturb the scores.
    s = jnp.einsum("bqd,bkd->bqk",
                   q.astype(compute_dtype), k.astype(compute_dtype),
                   preferred_element_type=jnp.float32)            # (Bb, S, S)

    # Numerically-stable softmax numerator, kept in f32.
    m = jnp.max(s, axis=-1, keepdims=True)
    e = jnp.exp(s - m)
    denom = jnp.sum(e, axis=-1, keepdims=True)                    # (Bb, S, 1)

    # Deferred normalization: PV matmul on the unnormalized numerator, then one
    # (Bb, S, Dp) scale by 1/denom (EUP approx reciprocal by default).
    out = jnp.einsum("bqk,bkd->bqd",
                     e.astype(compute_dtype), v.astype(compute_dtype),
                     preferred_element_type=jnp.float32)          # (Bb, S, Dp)
    inv = pl.reciprocal(denom, approx=True) if approx_recip else 1.0 / denom
    o_ref[...] = (out * inv).reshape(mb, d_pad).astype(o_ref.dtype)


def _vmem_capacity_bytes():
    """Best-effort per-core VMEM capacity; conservative 64 MiB (v7x) fallback."""
    try:
        info = pltpu.get_tpu_info()
        cap = int(getattr(info, "vmem_capacity_bytes", 0))
        if cap > 0:
            return cap
    except Exception:
        pass
    return 64 * 1024 * 1024


def _pick_batch_block(B, S, target_rows):
    """Divisor Bb of B; each grid step processes Mb = Bb*S rows.

    Rules:
      * S % 8 != 0  -> Bb = B (single full-array block keeps the BlockSpec legal
        without sublane-crossing sub-blocks).  # TODO(synk): pad S instead.
      * keep >= 2 grid steps when possible (megacore / v7x dual-TC sharding),
      * Mb <= target_rows,
      * prefer Mb that is a multiple of 256 (v6e/v7x MXU rows), then 128 (v5e),
        then the largest fitting Mb.
    """
    if S % 8 != 0:
        return B
    divisors = [bb for bb in range(1, B + 1) if B % bb == 0]
    multi = [bb for bb in divisors if B // bb >= 2]
    if multi:
        divisors = multi
    fitting = [bb for bb in divisors if bb * S <= max(target_rows, S)]
    if not fitting:
        return 1

    def score(bb):
        rows = bb * S
        align = 2 if rows % 256 == 0 else (1 if rows % 128 == 0 else 0)
        return (align, rows)

    return max(fitting, key=score)


def prepare_fused_qkv(wq, wk, wv, bq, bk, bv, *, compute_dtype=jnp.bfloat16):
    """One-time host-side weight prep (cache/reuse the result across calls).

    Returns (w_fused, b_fused, Dp, D_out) where
      w_fused: (D_in, 3*Dp) in compute_dtype = [Wq.T*scale | Wk.T | Wv.T] padded
      b_fused: (1, 3*Dp) f32 = [bq*scale | bk | bv] padded
    """
    D_out, D_in = wq.shape
    Dp = ((D_out + 127) // 128) * 128            # lane-dense padded head dim
    scale = 1.0 / math.sqrt(float(D_out))        # PyTorch: k.shape[-1]**0.5

    def pad_w(w_t, s=1.0):                       # (D_in, D_out) -> (D_in, Dp)
        return jnp.pad(w_t.astype(jnp.float32) * s, ((0, 0), (0, Dp - D_out)))

    def pad_b(bvec, s=1.0):                      # (D_out,) -> (Dp,)
        return jnp.pad(bvec.astype(jnp.float32) * s, (0, Dp - D_out))

    w_fused = jnp.concatenate(
        [pad_w(wq.T, scale), pad_w(wk.T), pad_w(wv.T)], axis=1
    ).astype(compute_dtype)                                        # (D_in, 3*Dp)
    b_fused = jnp.concatenate(
        [pad_b(bq, scale), pad_b(bk), pad_b(bv)]
    ).reshape(1, 3 * Dp).astype(jnp.float32)                       # (1, 3*Dp)
    return w_fused, b_fused, Dp, D_out


def self_attention_fused(x, w_fused, b_fused, d_out, *,
                         compute_dtype=jnp.bfloat16, approx_recip=True,
                         target_rows=None):
    """x: (B, S, D_in); w_fused/b_fused from prepare_fused_qkv(compute_dtype=...)."""
    B, S, D_in = x.shape
    Dp = w_fused.shape[1] // 3

    vmem_cap = _vmem_capacity_bytes()
    if target_rows is None:
        # Bigger row blocks amortize the ~0.35us/step overhead; 512 on v5e/v6e
        # (128 MiB VMEM), 256 on v7x (64 MiB per TC).
        target_rows = 512 if vmem_cap >= (96 << 20) else 256

    Bb = _pick_batch_block(B, S, target_rows)
    Mb = Bb * S
    grid = (B // Bb,)

    x2 = x.reshape(B * S, D_in)                  # contiguous, free

    # Per-step VMEM budget: double-buffered blocks + live intermediates, with
    # headroom, capped at 3/4 of physical VMEM (never request all of v7x).
    cd_bytes = jnp.dtype(compute_dtype).itemsize
    x_bytes = jnp.dtype(x.dtype).itemsize
    blocks = 2 * (Mb * D_in * x_bytes + D_in * 3 * Dp * cd_bytes
                  + 3 * Dp * 4 + Mb * Dp * x_bytes)
    interm = (Mb * 3 * Dp) * (4 + cd_bytes)      # qkv f32 + compute-dtype casts
    interm += Bb * S * S * (8 + cd_bytes)        # s, e (f32) + bf16 copy of e
    interm += Mb * Dp * 8                        # unnormalized out + store slab
    vmem_limit = min(max(2 * (blocks + interm) + (8 << 20), 32 << 20),
                     (vmem_cap * 3) // 4)

    kernel = functools.partial(
        _fused_attn_kernel, batches_per_block=Bb, seq_len=S, d_pad=Dp,
        compute_dtype=compute_dtype, approx_recip=approx_recip)

    out2 = pl.pallas_call(
        kernel,
        out_shape=jax.ShapeDtypeStruct((B * S, Dp), x.dtype),
        grid_spec=pltpu.PrefetchScalarGridSpec(
            num_scalar_prefetch=0,
            grid=grid,
            in_specs=[
                pl.BlockSpec((Mb, D_in), lambda i: (i, 0)),       # x row-block
                # W/b index_maps are constant across the grid; a single buffer
                # (pipeline_mode=pl.Buffered(1)) would shave one W copy of VMEM
                # but is left out for lowering portability.
                pl.BlockSpec((D_in, 3 * Dp), lambda i: (0, 0)),   # fused W
                pl.BlockSpec((1, 3 * Dp), lambda i: (0, 0)),      # fused bias
            ],
            out_specs=pl.BlockSpec((Mb, Dp), lambda i: (i, 0)),
        ),
        compiler_params=pltpu.CompilerParams(
            dimension_semantics=("parallel",),
            vmem_limit_bytes=int(vmem_limit),
        ),
    )(x2, w_fused, b_fused)

    if Dp == d_out:
        return out2.reshape(B, S, d_out)          # lane-dense: no slice copy
    return out2[:, :d_out].reshape(B, S, d_out)


def self_attention(x, wq, wk, wv, bq, bk, bv, *,
                   compute_dtype=jnp.bfloat16, approx_recip=True,
                   target_rows=None):
    """Convenience wrapper (prepares fused weights each call; prefer caching
    prepare_fused_qkv() output and calling self_attention_fused directly)."""
    w_fused, b_fused, _, d_out = prepare_fused_qkv(
        wq, wk, wv, bq, bk, bv, compute_dtype=compute_dtype)
    return self_attention_fused(
        x, w_fused, b_fused, d_out, compute_dtype=compute_dtype,
        approx_recip=approx_recip, target_rows=target_rows)


def reference_self_attention(x, wq, wk, wv, bq, bk, bv):
    q = jnp.einsum("bsd,od->bso", x, wq) + bq
    k = jnp.einsum("bsd,od->bso", x, wk) + bk
    v = jnp.einsum("bsd,od->bso", x, wv) + bv
    scores = jnp.einsum("bqo,bko->bqk", q, k) / jnp.sqrt(jnp.float32(wq.shape[0]))
    attn = jax.nn.softmax(scores, axis=-1)
    return jnp.einsum("bqk,bko->bqo", attn, v)


if __name__ == "__main__":
    B, S, D_in, D_out = 2, 8, 32, 32

    key = jax.random.PRNGKey(0)
    kx, kq, kk, kv = jax.random.split(key, 4)

    x = jax.random.normal(kx, (B, S, D_in), dtype=jnp.float32)

    # Mimic init_weights(): uniform(-0.1, 0.1) weights, zero biases.
    initrange = 0.1
    wq = jax.random.uniform(kq, (D_out, D_in), jnp.float32, -initrange, initrange)
    wk = jax.random.uniform(kk, (D_out, D_in), jnp.float32, -initrange, initrange)
    wv = jax.random.uniform(kv, (D_out, D_in), jnp.float32, -initrange, initrange)
    bq = jnp.zeros((D_out,), jnp.float32)
    bk = jnp.zeros((D_out,), jnp.float32)
    bv = jnp.zeros((D_out,), jnp.float32)

    ref = reference_self_attention(x, wq, wk, wv, bq, bk, bv)

    # Default fast path: bf16 MXU operands (f32 accumulation), EUP approx recip.
    w_f, b_f, _, d_out = prepare_fused_qkv(wq, wk, wv, bq, bk, bv,
                                           compute_dtype=jnp.bfloat16)
    out = jax.block_until_ready(
        self_attention_fused(x, w_f, b_f, d_out, compute_dtype=jnp.bfloat16))
    assert out.shape == (B, S, D_out)
    assert jnp.allclose(out, ref, atol=3e-2, rtol=3e-2), "bf16 path mismatch"

    # Strict f32 path (exact reciprocal) for parity checks.
    out_f32 = jax.block_until_ready(
        self_attention(x, wq, wk, wv, bq, bk, bv,
                       compute_dtype=jnp.float32, approx_recip=False))
    assert jnp.allclose(out_f32, ref, atol=1e-4, rtol=1e-4), "f32 path mismatch"

    print("KERNEL_OK")
</pallas_src>

<mosaic_0001>
module attributes {stable_mosaic.version = 11 : i64} {
  func.func @_fused_attn_kernel(%arg0: i32, %arg1: memref<8x32xf32, #tpu.memory_space<vmem>>, %arg2: memref<32x384xbf16, #tpu.memory_space<vmem>>, %arg3: memref<1x384xf32, #tpu.memory_space<vmem>>, %arg4: memref<8x128xf32, #tpu.memory_space<vmem>>) attributes {dimension_semantics = [#tpu.dimension_semantics<parallel>], iteration_bounds = array<i64: 2>, scalar_prefetch = 0 : i64, scratch_operands = 0 : i64, tpu.core_type = #tpu.core_type<tc>, window_params = [{transform_indices = @transform_0, window_bounds = array<i64: 8, 32>}, {pipeline_mode = #tpu.pipeline_mode<synchronous>, transform_indices = @transform_1, window_bounds = array<i64: 32, 384>}, {pipeline_mode = #tpu.pipeline_mode<synchronous>, transform_indices = @transform_2, window_bounds = array<i64: 1, 384>}, {transform_indices = @transform_3, window_bounds = array<i64: 8, 128>}]} {
    %c0 = arith.constant 0 : index
    %c0_0 = arith.constant 0 : index
    %0 = vector.load %arg1[%c0, %c0_0] : memref<8x32xf32, #tpu.memory_space<vmem>>, vector<8x32xf32>
    %1 = arith.truncf %0 : vector<8x32xf32> to vector<8x32xbf16>
    %c0_1 = arith.constant 0 : index
    %c0_2 = arith.constant 0 : index
    %2 = vector.load %arg2[%c0_1, %c0_2] : memref<32x384xbf16, #tpu.memory_space<vmem>>, vector<32x384xbf16>
    %c0_3 = arith.constant 0 : index
    %c0_4 = arith.constant 0 : index
    %3 = vector.load %arg3[%c0_3, %c0_4] : memref<1x384xf32, #tpu.memory_space<vmem>>, vector<1x384xf32>
    %cst = arith.constant dense<0.000000e+00> : vector<8x384xf32>
    %4 = tpu.matmul %1, %2, %cst {dimension_numbers = #tpu.dot_dimension_numbers<[1], [0], [0], [1], [0, 0, 1, 1], [], []>} : vector<8x32xbf16>, vector<32x384xbf16>, vector<8x384xf32> -> vector<8x384xf32>
    %5 = vector.broadcast %3 : vector<1x384xf32> to vector<8x384xf32>
    %6 = arith.addf %4, %5 : vector<8x384xf32>
    %7 = vector.extract_strided_slice %6 {offsets = [0, 0], sizes = [8, 128], strides = [1, 1]} : vector<8x384xf32> to vector<8x128xf32>
    %8 = vector.shape_cast %7 : vector<8x128xf32> to vector<1x8x128xf32>
    %9 = vector.extract_strided_slice %6 {offsets = [0, 128], sizes = [8, 128], strides = [1, 1]} : vector<8x384xf32> to vector<8x128xf32>
    %10 = vector.shape_cast %9 : vector<8x128xf32> to vector<1x8x128xf32>
    %11 = vector.extract_strided_slice %6 {offsets = [0, 256], sizes = [8, 128], strides = [1, 1]} : vector<8x384xf32> to vector<8x128xf32>
    %12 = vector.shape_cast %11 : vector<8x128xf32> to vector<1x8x128xf32>
    %13 = arith.truncf %8 : vector<1x8x128xf32> to vector<1x8x128xbf16>
    %14 = arith.truncf %10 : vector<1x8x128xf32> to vector<1x8x128xbf16>
    "tpu.trace_start"() <{level = 10 : i32, message = "bqd,bkd->bqk"}> : () -> ()
    %cst_5 = arith.constant dense<0.000000e+00> : vector<1x8x8xf32>
    %15 = tpu.matmul %13, %14, %cst_5 {dimension_numbers = #tpu.dot_dimension_numbers<[2], [2], [1], [1], [0, 0, 0, 1, 1, 1], [0], [0]>} : vector<1x8x128xbf16>, vector<1x8x128xbf16>, vector<1x8x8xf32> -> vector<1x8x8xf32>
    "tpu.trace_stop"() : () -> ()
    %cst_6 = arith.constant dense<0xFF800000> : vector<1x8xf32>
    %16 = vector.multi_reduction <maximumf>, %15, %cst_6 [2] : vector<1x8x8xf32> to vector<1x8xf32>
    %17 = vector.shape_cast %16 : vector<1x8xf32> to vector<1x8x1xf32>
    %18 = vector.broadcast %17 : vector<1x8x1xf32> to vector<1x8x8xf32>
    %19 = arith.subf %15, %18 : vector<1x8x8xf32>
    %20 = math.exp %19 : vector<1x8x8xf32>
    %cst_7 = arith.constant dense<0.000000e+00> : vector<1x8xf32>
    %21 = vector.multi_reduction <add>, %20, %cst_7 [2] : vector<1x8x8xf32> to vector<1x8xf32>
    %22 = vector.shape_cast %21 : vector<1x8xf32> to vector<1x8x1xf32>
    %23 = arith.truncf %20 : vector<1x8x8xf32> to vector<1x8x8xbf16>
    %24 = arith.truncf %12 : vector<1x8x128xf32> to vector<1x8x128xbf16>
    "tpu.trace_start"() <{level = 10 : i32, message = "bqk,bkd->bqd"}> : () -> ()
    %cst_8 = arith.constant dense<0.000000e+00> : vector<1x8x128xf32>
    %25 = tpu.matmul %23, %24, %cst_8 {dimension_numbers = #tpu.dot_dimension_numbers<[2], [1], [1], [2], [0, 0, 0, 1, 1, 2], [0], [0]>} : vector<1x8x8xbf16>, vector<1x8x128xbf16>, vector<1x8x128xf32> -> vector<1x8x128xf32>
    "tpu.trace_stop"() : () -> ()
    %26 = tpu.reciprocal %22 {approx = true} : vector<1x8x1xf32> -> vector<1x8x1xf32>
    %27 = vector.broadcast %26 : vector<1x8x1xf32> to vector<1x8x128xf32>
    %28 = arith.mulf %25, %27 : vector<1x8x128xf32>
    %29 = vector.shape_cast %28 : vector<1x8x128xf32> to vector<8x128xf32>
    %c0_9 = arith.constant 0 : index
    %c0_10 = arith.constant 0 : index
    %30 = vector.load %arg4[%c0_9, %c0_10] : memref<8x128xf32, #tpu.memory_space<vmem>>, vector<8x128xf32>
    tpu.vector_store %arg4[%c0_9, %c0_10], %29 {strides = array<i32>} : memref<8x128xf32, #tpu.memory_space<vmem>>, vector<8x128xf32>,
    return
  }
  func.func @transform_0(%arg0: i32) -> (i32, i32) {
    %c0_i32 = arith.constant 0 : i32
    %c0_i32_0 = arith.constant 0 : i32
    return %arg0, %c0_i32 : i32, i32
  }
  func.func @transform_1(%arg0: i32) -> (i32, i32) {
    %c0_i32 = arith.constant 0 : i32
    %c0_i32_0 = arith.constant 0 : i32
    %c0_i32_1 = arith.constant 0 : i32
    return %c0_i32, %c0_i32_0 : i32, i32
  }
  func.func @transform_2(%arg0: i32) -> (i32, i32) {
    %c0_i32 = arith.constant 0 : i32
    %c0_i32_0 = arith.constant 0 : i32
    %c0_i32_1 = arith.constant 0 : i32
    return %c0_i32, %c0_i32_0 : i32, i32
  }
  func.func @transform_3(%arg0: i32) -> (i32, i32) {
    %c0_i32 = arith.constant 0 : i32
    %c0_i32_0 = arith.constant 0 : i32
    return %arg0, %c0_i32 : i32, i32
  }
}

</mosaic_0001>

<llo_original>
// kernel: tpu_custom_call.1
$region0: #{tpu_custom_call.1}
  #allocation0 [shape = 'u32[]', space=smem, size = 0x4, offset = 0x4, fixed_abs, tag = 'smem constant byte address 0x4 - core index']
  #allocation1 [shape = 'u32[144,128]{1,0:T(1,128)}', space=vmem, size = 0x12000, scoped, tag = 'internal scratch']
  %s0 = inlined_call_operand.hbm [shape: f32[16,32], index: 0, kind: input, shape index: {}]
  %s1 = inlined_call_operand.hbm [shape: bf16[32,384], index: 1, kind: input, shape index: {}]
  %s2 = inlined_call_operand.vmem [shape: f32[1,384], index: 2, kind: input, shape index: {}]
  %s3 = inlined_call_operand.hbm [shape: f32[16,128], index: 3, kind: output, shape index: {}]
  %s4 = sld [smem:[#allocation0]]
  $region53: #{tpu_custom_call.1} parent=0
    _
  %s6 = ssub.s32 1, %s4
  %s7 = scalar_select 0, %s6, %s4
  $region1: #{tpu_custom_call.1} parent=0
    #allocation2 [shape = 'u8[8192]{0}', space=vmem, size = 0x2000, scoped, tag = 'input window, operand 0']
    #allocation3 [shape = 's32[2]{0}', space=sflag, size = 0x8, scoped, tag = 'scoped memory for tpu_custom_call.1']
    #allocation4 [shape = 's32[2]{0}', space=sflag, size = 0x8, scoped, tag = 'scoped memory for tpu_custom_call.1']
    #allocation5 [shape = 'u8[24576]{0}', space=vmem, size = 0x6000, scoped, tag = 'input window, operand 1, single buffered']
    #allocation6 [shape = 's32[1]{0}', space=sflag, size = 0x4, scoped, tag = 'scoped memory for tpu_custom_call.1']
    #allocation7 [shape = 'u8[8192]{0}', space=vmem, size = 0x2000, scoped, tag = 'output window, operand 0']
    %8 = vsyncpa [#allocation3], 0
    %s9 = scalar_lea.sflag [#allocation3], 1
    %10 = vsyncpa %s9, 0
    %11 = vsyncpa [#allocation6], 0
    %12 = vsyncpa [#allocation4], 0
    %s13 = scalar_lea.sflag [#allocation4], 1
    %14 = vsyncpa %s13, 0
    loop: start=0, step=1, limit=4
    $region2: #{tpu_custom_call.1} parent=1 // loop_pre_header
      _
    $region3: #{tpu_custom_call.1} parent=1 // loop_header
      %s16 = sphi 0, %s20
      %p17 = scmp.ge.s32.totalorder %s16, 4
      %s26 = sphi 0, %s28
      %s29 = sphi 0, %s26
      %s30 = sphi 0, %s29
      %s46 = sphi 0, %s30
      %s50 = sphi 0, %s50
      %s52 = sphi 0, %s50
      %s53 = sphi 0, %s52
      %s67 = sphi 0, %s53
      %s71 = sphi 0, %s71
      %s73 = sphi 0, %s71
      %s74 = sphi 0, %s73
      %s88 = sphi 0, %s74
      %s94 = sphi 0, %s96
      %s97 = sphi 0, %s94
      %s98 = sphi 0, %s97
      %s114 = sphi 0, %s98
    $region4: #{tpu_custom_call.1} parent=1 // loop_header_branch
      %19 = sbr.rel (%p17) target = $region8
    $region5: #{tpu_custom_call.1} parent=1 // loop_body
      %s21 = ssub.s32 %s16, 1
      %s22 = ssub.s32 %s16, 2
      %s23 = sadd.s32 %s16, 1
      %s24 = ssub.s32 %s16, %s23
      %p25 = scmp.eq.s32.totalorder %s24, 0
      %s27 = sadd.s32 %s26, 1
      %s28 = scalar_select %p25, %s26, %s27
      %p31 = pneg %p25
      %p32 = scmp.eq.s32.totalorder %s16, 1
      %p33 = por %p31, %p32
      %p34 = scmp.ne.s32.totalorder %s26, %s29
      %p35 = scmp.eq.s32.totalorder %s16, 0
      %p36 = por %p34, %p35
      %p37 = scmp.ne.s32.totalorder %s26, %s29
      %p38 = scmp.eq.s32.totalorder %s21, 1
      %p39 = por %p37, %p38
      %p40 = scmp.ne.s32.totalorder %s29, %s30
      %p41 = scmp.eq.s32.totalorder %s21, 0
      %p42 = por %p40, %p41
      %p43 = scmp.ne.s32.totalorder %s29, %s30
      %p44 = scmp.eq.s32.totalorder %s22, 1
      %p45 = por %p43, %p44
      %p47 = scmp.ne.s32.totalorder %s30, %s46
      %p48 = scmp.eq.s32.totalorder %s22, 0
      %p49 = por %p47, %p48
      %s51 = sadd.s32 %s50, 1
      %p54 = scmp.eq.s32.totalorder %s16, 1
      %p55 = scmp.ne.s32.totalorder %s50, %s52
      %p56 = scmp.eq.s32.totalorder %s16, 0
      %p57 = por %p55, %p56
      %p58 = scmp.ne.s32.totalorder %s50, %s52
      %p59 = scmp.eq.s32.totalorder %s21, 1
      %p60 = por %p58, %p59
      %p61 = scmp.ne.s32.totalorder %s52, %s53
      %p62 = scmp.eq.s32.totalorder %s21, 0
      %p63 = por %p61, %p62
      %p64 = scmp.ne.s32.totalorder %s52, %s53
      %p65 = scmp.eq.s32.totalorder %s22, 1
      %p66 = por %p64, %p65
      %p68 = scmp.ne.s32.totalorder %s53, %s67
      %p69 = scmp.eq.s32.totalorder %s22, 0
      %p70 = por %p68, %p69
      %s72 = sadd.s32 %s71, 1
      %p75 = scmp.eq.s32.totalorder %s16, 1
      %p76 = scmp.ne.s32.totalorder %s71, %s73
      %p77 = scmp.eq.s32.totalorder %s16, 0
      %p78 = por %p76, %p77
      %p79 = scmp.ne.s32.totalorder %s71, %s73
      %p80 = scmp.eq.s32.totalorder %s21, 1
      %p81 = por %p79, %p80
      %p82 = scmp.ne.s32.totalorder %s73, %s74
      %p83 = scmp.eq.s32.totalorder %s21, 0
      %p84 = por %p82, %p83
      %p85 = scmp.ne.s32.totalorder %s73, %s74
      %p86 = scmp.eq.s32.totalorder %s22, 1
      %p87 = por %p85, %p86
      %p89 = scmp.ne.s32.totalorder %s74, %s88
      %p90 = scmp.eq.s32.totalorder %s22, 0
      %p91 = por %p89, %p90
      %s92 = ssub.s32 %s16, %s23
      %p93 = scmp.eq.s32.totalorder %s92, 0
      %s95 = sadd.s32 %s94, 1
      %s96 = scalar_select %p93, %s94, %s95
      %p99 = pneg %p93
      %p100 = scmp.eq.s32.totalorder %s16, 1
      %p101 = por %p99, %p100
      %p102 = scmp.ne.s32.totalorder %s94, %s97
      %p103 = scmp.eq.s32.totalorder %s16, 0
      %p104 = por %p102, %p103
      %p105 = scmp.ne.s32.totalorder %s94, %s97
      %p106 = scmp.eq.s32.totalorder %s21, 1
      %p107 = por %p105, %p106
      %p108 = scmp.ne.s32.totalorder %s97, %s98
      %p109 = scmp.eq.s32.totalorder %s21, 0
      %p110 = por %p108, %p109
      %p111 = scmp.ne.s32.totalorder %s97, %s98
      %p112 = scmp.eq.s32.totalorder %s22, 1
      %p113 = por %p111, %p112
      %p115 = scmp.ne.s32.totalorder %s98, %s114
      %p116 = scmp.eq.s32.totalorder %s22, 0
      %p117 = por %p115, %p116
      %p118 = scmp.le.s32.totalorder 1, %s16
      %p119 = scmp.lt.s32.totalorder %s16, 3
      %p120 = pnand %p118, %p119
      %p121 = pneg %p120
      // Predicated region
      $region9: #{tpu_custom_call.1} parent=5 // pred_check
        _
      $region10: #{tpu_custom_call.1} parent=5 // pred_check_branch
        %123 = sbr.rel (%p120) target = $region12
      $region11: #{tpu_custom_call.1} parent=5 // pred_region
        %s124 = ssub.s32 %s16, 1
        // Predicated region
        $region13: #{tpu_custom_call.1} parent=11 // pred_check
          %p125 = pneg %p63
        $region14: #{tpu_custom_call.1} parent=11 // pred_check_branch
          %127 = sbr.rel (%p125) target = $region16
        $region15: #{tpu_custom_call.1} parent=11 // pred_region
          %s129 = ssub.s32 768, 768
          %130 = vsyncadd [#allocation6], %s129
          %s131 = sshll.u32 [#allocation5], 4
          %s132 = int_to_ptr.vmem [resolvable:$true] %s131
          %137 = dma.hbm_to_vmem [thread:$0]  %s1, 768, %s132, [#allocation6], 192, 192, 12
        $region16: #{tpu_custom_call.1} parent=11 // pred_fallthru
          _
        // Predicated region
        $region17: #{tpu_custom_call.1} parent=11 // pred_check
          %p138 = pneg %p84
        $region18: #{tpu_custom_call.1} parent=11 // pred_check_branch
          %140 = sbr.rel (%p138) target = $region20
        $region19: #{tpu_custom_call.1} parent=11 // pred_region
          _
        $region20: #{tpu_custom_call.1} parent=11 // pred_fallthru
          _
      $region12: #{tpu_custom_call.1} parent=5 // pred_fallthru
        _
      %p141 = scmp.lt.s32.totalorder %s16, 2
      // Predicated region
      $region21: #{tpu_custom_call.1} parent=5 // pred_check
        %p142 = pneg %p141
      $region22: #{tpu_custom_call.1} parent=5 // pred_check_branch
        %144 = sbr.rel (%p142) target = $region24
      $region23: #{tpu_custom_call.1} parent=5 // pred_region
        // Predicated region
        $region25: #{tpu_custom_call.1} parent=23 // pred_check
          %p145 = pneg %p36
        $region26: #{tpu_custom_call.1} parent=23 // pred_check_branch
          %147 = sbr.rel (%p145) target = $region28
        $region27: #{tpu_custom_call.1} parent=23 // pred_region
          %s148 = sand.u32 %s26, 1
          %s149 = scalar_lea.sflag [#allocation3], %s148
          %s150 = sand.u32 %s26, 1
          %s151 = smul.addr %s150, 8
          %s152 = scalar_lea.vmem [#allocation2], %s151
          %s154 = ssub.s32 128, 128
          %155 = vsyncadd %s149, %s154
          %s156 = smul.addr %s16, 128
          %s157 = scalar_lea.hbm %s0, %s156
          %s159 = sshll.u32 %s152, 4
          %s160 = int_to_ptr.vmem [resolvable:$true] %s159
          %162 = dma.hbm_to_vmem [thread:$0]  %s157, 128, %s160, %s149
        $region28: #{tpu_custom_call.1} parent=23 // pred_fallthru
          _
      $region24: #{tpu_custom_call.1} parent=5 // pred_fallthru
        _
      %p163 = scmp.le.s32.totalorder 1, %s16
      %p164 = scmp.lt.s32.totalorder %s16, 3
      %p165 = pnand %p163, %p164
      %p166 = pneg %p165
      // Predicated region
      $region29: #{tpu_custom_call.1} parent=5 // pred_check
        _
      $region30: #{tpu_custom_call.1} parent=5 // pred_check_branch
        %168 = sbr.rel (%p165) target = $region32
      $region31: #{tpu_custom_call.1} parent=5 // pred_region
        %s169 = ssub.s32 %s16, 1
        %s170 = sand.u32 %s29, 1
        %s171 = scalar_lea.sflag [#allocation3], %s170
        %s172 = sand.u32 %s29, 1
        %s173 = smul.addr %s172, 8
        %s174 = scalar_lea.vmem [#allocation2], %s173
        // Predicated region
        $region33: #{tpu_custom_call.1} parent=31 // pred_check
          %p175 = pneg %p42
        $region34: #{tpu_custom_call.1} parent=31 // pred_check_branch
          %177 = sbr.rel (%p175) target = $region36
        $region35: #{tpu_custom_call.1} parent=31 // pred_region
          %178 = dma.done %s171, 128
        $region36: #{tpu_custom_call.1} parent=31 // pred_fallthru
          _
        // Predicated region
        $region37: #{tpu_custom_call.1} parent=31 // pred_check
          %p179 = pneg %p63
        $region38: #{tpu_custom_call.1} parent=31 // pred_check_branch
          %181 = sbr.rel (%p179) target = $region40
        $region39: #{tpu_custom_call.1} parent=31 // pred_region
          %182 = dma.done [#allocation6], 768
        $region40: #{tpu_custom_call.1} parent=31 // pred_fallthru
          _
        %s183 = sand.u32 %s29, 1
        %s184 = scalar_lea.sflag [#allocation3], %s183
        %s185 = sand.u32 %s29, 1
        %s186 = smul.addr %s185, 8
        %s187 = scalar_lea.vmem [#allocation2], %s186
        %p188 = pneg %p42
        %p189 = pneg %p39
        %p190 = pneg %p63
        %p191 = pneg %p60
        %p192 = pneg %p84
        %p193 = pneg %p81
        %p194 = pneg %p110
        %p195 = pneg %p107
        %s196 = sand.u32 %s97, 1
        %s197 = scalar_lea.sflag [#allocation4], %s196
        %s198 = sand.u32 %s97, 1
        %s199 = smul.addr %s198, 8
        %s200 = scalar_lea.vmem [#allocation7], %s199
        %v202 = vld [vmem:[%s174] sm:$0xff]
        %v203 = vpack.c.bf16 %v202, %v202
        %v204 = vld [vmem:[#allocation5] sm:$0xff]
        %v205 = vld [vmem:[#allocation5 + $0x8] sm:$0xf]
        %v206 = vld [vmem:[#allocation5 + $0xc] sm:$0xff]
        %v207 = vld [vmem:[#allocation5 + $0x14] sm:$0xf]
        %v208 = vld [vmem:[#allocation5 + $0x18] sm:$0xff]
        %v209 = vld [vmem:[#allocation5 + $0x20] sm:$0xf]
        %v210 = vld [vmem:[#allocation5 + $0x24] sm:$0xff]
        %v211 = vld [vmem:[#allocation5 + $0x2c] sm:$0xf]
        %v212 = vld [vmem:[%s2] sm:$0x7]
        %v214 = vlaneseq
        %v215 = vshrl.u32 %v214, 7
        %v216 = vsub.s32 0, %v215
        %v217 = vrot.slane %v212, %v216
        %v218 = vlaneseq
        %v219 = vshrl.u32 %v218, 7
        %v220 = vsub.s32 1, %v219
        %v221 = vrot.slane %v212, %v220
        %v222 = vlaneseq
        %v223 = vshrl.u32 %v222, 7
        %v224 = vsub.s32 2, %v223
        %v225 = vrot.slane %v212, %v224
        %v237 = vunpack.c.l.b16 %v204
        %v238 = vunpack.c.h.b16 %v204
        %v239 = vunpack.c.l.b16 %v205
        %v240 = vunpack.c.l.b16 %v206
        %v241 = vunpack.c.h.b16 %v206
        %v242 = vunpack.c.l.b16 %v207
        %v243 = vunpack.c.l.b16 %v208
        %v244 = vunpack.c.h.b16 %v208
        %v245 = vunpack.c.l.b16 %v209
        %v246 = vunpack.c.l.b16 %v210
        %v247 = vunpack.c.h.b16 %v210
        %v248 = vunpack.c.l.b16 %v211
        %v249 = vpack.c.b16 %v240, %v237
        %v250 = vpack.c.b16 %v241, %v238
        %v251 = vpack.c.b16 %v242, %v239
        %v252 = vpack.c.b16 %v246, %v243
        %v253 = vpack.c.b16 %v247, %v244
        %v254 = vpack.c.b16 %v248, %v245
        %vm261 = vcmask 261120
        %v263 = vsel %vm261, %v203, 0
        %265 = vmatprep.subr.bf16.mxu0 0
        %266 = vmatpush1.bf16.msra.mxu0 0
        %267 = vmatprep.subr.bf16.mxu0 0
        %268 = vmatpush1.bf16.msra.mxu0 0
        %269 = vmatprep.subr.bf16.mxu0 0
        %270 = vmatpush1.bf16.msra.mxu0 0
        %271 = vmatprep.subr.bf16.mxu0 0
        %272 = vmatpush1.bf16.msra.mxu0 0
        %273 = vmatprep.subr.bf16.mxu0 0
        %274 = vmatpush1.bf16.msra.mxu0 0
        %275 = vmatprep.subr.bf16.mxu0 0
        %276 = vmatpush1.bf16.msra.mxu0 0
        %277 = vmatprep.subr.bf16.mxu0 %v253
        %278 = vmatpush1.bf16.msra.mxu0 %v252
        %279 = vmatprep.subr.bf16.mxu0 %v250
        %280 = vmatpush1.bf16.msra.mxu0 %v249
        %281 = vmatprep.subr.bf16.mxu0 0
        %282 = vmatpush2.bf16.msra.mxu0 0
        %283 = vmatprep.subr.bf16.mxu0 0
        %284 = vmatpush2.bf16.msra.mxu0 0
        %285 = vmatprep.subr.bf16.mxu0 0
        %286 = vmatpush2.bf16.msra.mxu0 0
        %287 = vmatprep.subr.bf16.mxu0 0
        %288 = vmatpush2.bf16.msra.mxu0 0
        %289 = vmatprep.subr.bf16.mxu0 0
        %290 = vmatpush2.bf16.msra.mxu0 0
        %291 = vmatprep.subr.bf16.mxu0 0
        %292 = vmatpush2.bf16.msra.mxu0 0
        %293 = vmatprep.subr.bf16.mxu0 0
        %294 = vmatpush2.bf16.msra.mxu0 0
        %295 = vmatprep.subr.bf16.mxu0 0
        %296 = vmatpush2.bf16.msra.mxu0 0
        %297 = vmatprep.mubr.bf16.mxu0 0
        %298 = vmatmul.mubr.bf16.gmra.mxu0 %v263
        %v299 = vpop.f32.mrf.mxu0
        %v300 = vadd.f32 %v217, %v299
        %v301 = vpop.f32.mrf.mxu0
        %v302 = vadd.f32 %v221, %v301
        %v303 = vpop.f32.mrf.mxu0
        %v304 = vpop.f32.mrf.mxu0
        %305 = vdwg.mxu0
        %306 = vmatprep.subr.bf16.mxu0 0
        %307 = vmatpush1.bf16.msra.mxu0 0
        %308 = vmatprep.subr.bf16.mxu0 0
        %309 = vmatpush1.bf16.msra.mxu0 0
        %310 = vmatprep.subr.bf16.mxu0 0
        %311 = vmatpush1.bf16.msra.mxu0 0
        %312 = vmatprep.subr.bf16.mxu0 0
        %313 = vmatpush1.bf16.msra.mxu0 0
        %314 = vmatprep.subr.bf16.mxu0 0
        %315 = vmatpush1.bf16.msra.mxu0 0
        %316 = vmatprep.subr.bf16.mxu0 0
        %317 = vmatpush1.bf16.msra.mxu0 0
        %318 = vmatprep.subr.bf16.mxu0 0
        %319 = vmatpush1.bf16.msra.mxu0 %v254
        %320 = vmatprep.subr.bf16.mxu0 0
        %321 = vmatpush1.bf16.msra.mxu0 %v251
        %322 = vmatprep.subr.bf16.mxu0 0
        %323 = vmatpush2.bf16.msra.mxu0 0
        %324 = vmatprep.subr.bf16.mxu0 0
        %325 = vmatpush2.bf16.msra.mxu0 0
        %326 = vmatprep.subr.bf16.mxu0 0
        %327 = vmatpush2.bf16.msra.mxu0 0
        %328 = vmatprep.subr.bf16.mxu0 0
        %329 = vmatpush2.bf16.msra.mxu0 0
        %330 = vmatprep.subr.bf16.mxu0 0
        %331 = vmatpush2.bf16.msra.mxu0 0
        %332 = vmatprep.subr.bf16.mxu0 0
        %333 = vmatpush2.bf16.msra.mxu0 0
        %334 = vmatprep.subr.bf16.mxu0 0
        %335 = vmatpush2.bf16.msra.mxu0 0
        %336 = vmatprep.subr.bf16.mxu0 0
        %337 = vmatpush2.bf16.msra.mxu0 0
        %338 = vmatprep.mubr.bf16.mxu0 0
        %339 = vmatmul.mubr.bf16.gmra.mxu0 %v263
        %v340 = vpop.f32.mrf.mxu0
        %v341 = vadd.f32 %v225, %v340
        %v342 = vpop.f32.mrf.mxu0
        %v343 = vpop.f32.mrf.mxu0
        %v344 = vpop.f32.mrf.mxu0
        %345 = vdwg.mxu0
        %v346 = vpack.c.bf16 %v300, %v300
        %v347 = vpack.c.bf16 %v302, %v302
        %348 = vmatprep.subr.bf16.mxu0 0
        %349 = vmatpush1.bf16.xpose.msra.mxu0 0
        %350 = vmatprep.subr.bf16.mxu0 0
        %351 = vmatpush1.bf16.xpose.msra.mxu0 0
        %352 = vmatprep.subr.bf16.mxu0 0
        %353 = vmatpush1.bf16.xpose.msra.mxu0 0
        %354 = vmatprep.subr.bf16.mxu0 0
        %355 = vmatpush1.bf16.xpose.msra.mxu0 0
        %356 = vmatprep.subr.bf16.mxu0 0
        %357 = vmatpush1.bf16.xpose.msra.mxu0 0
        %358 = vmatprep.subr.bf16.mxu0 0
        %359 = vmatpush1.bf16.xpose.msra.mxu0 0
        %360 = vmatprep.subr.bf16.mxu0 0
        %361 = vmatpush1.bf16.xpose.msra.mxu0 0
        %362 = vmatprep.subr.bf16.mxu0 0
        %363 = vmatpush1.bf16.xpose.msra.mxu0 %v347
        %364 = vmatprep.subr.bf16.mxu0 0
        %365 = vmatpush2.bf16.xpose.msra.mxu0 0
        %366 = vmatprep.subr.bf16.mxu0 0
        %367 = vmatpush2.bf16.xpose.msra.mxu0 0
        %368 = vmatprep.subr.bf16.mxu0 0
        %369 = vmatpush2.bf16.xpose.msra.mxu0 0
        %370 = vmatprep.subr.bf16.mxu0 0
        %371 = vmatpush2.bf16.xpose.msra.mxu0 0
        %372 = vmatprep.subr.bf16.mxu0 0
        %373 = vmatpush2.bf16.xpose.msra.mxu0 0
        %374 = vmatprep.subr.bf16.mxu0 0
        %375 = vmatpush2.bf16.xpose.msra.mxu0 0
        %376 = vmatprep.subr.bf16.mxu0 0
        %377 = vmatpush2.bf16.xpose.msra.mxu0 0
        %378 = vmatprep.subr.bf16.mxu0 0
        %379 = vmatpush2.bf16.xpose.msra.mxu0 0
        %380 = vmatprep.mubr.bf16.mxu0 0
        %381 = vmatmul.mubr.bf16.gmra.mxu0 %v346
        %v382 = vpop.f32.mrf.mxu0
        %v383 = vadd.f32 0.0, %v382
        %v384 = vpop.f32.mrf.mxu0
        %v385 = vpop.f32.mrf.mxu0
        %v386 = vpop.f32.mrf.mxu0
        %387 = vdwg.mxu0
        %vm388 = vcmask 64512
        %v389 = vsel %vm388, %v383, -inf
        %390 = vmax.xlane.f32.xlu0 %v389
        %v391 = vpop.xlane.xlu0 %390
        %v392 = vsub.f32 %v383, %v391
        %v393 = vmul.f32 %v392, 1.442695
        %v394 = vpow.pop %v393
        %v395 = vsel %vm388, %v394, 0.0
        %396 = vadd.xlane.f32.xlu0 %v395
        %v397 = vpop.xlane.xlu0 %396
        %v398 = vpack.c.bf16 %v394, %v394
        %v399 = vpack.c.bf16 %v341, %v341
        %v401 = vsel %vm388, %v398, 0
        %vm403 = vcmask 1043456
        %v405 = vsel %vm403, %v399, 0
        %407 = vmatprep.subr.bf16.mxu0 0
        %408 = vmatpush1.bf16.msra.mxu0 0
        %409 = vmatprep.subr.bf16.mxu0 0
        %410 = vmatpush1.bf16.msra.mxu0 0
        %411 = vmatprep.subr.bf16.mxu0 0
        %412 = vmatpush1.bf16.msra.mxu0 0
        %413 = vmatprep.subr.bf16.mxu0 0
        %414 = vmatpush1.bf16.msra.mxu0 0
        %415 = vmatprep.subr.bf16.mxu0 0
        %416 = vmatpush1.bf16.msra.mxu0 0
        %417 = vmatprep.subr.bf16.mxu0 0
        %418 = vmatpush1.bf16.msra.mxu0 0
        %419 = vmatprep.subr.bf16.mxu0 0
        %420 = vmatpush1.bf16.msra.mxu0 0
        %421 = vmatprep.subr.bf16.mxu0 0
        %422 = vmatpush1.bf16.msra.mxu0 %v405
        %423 = vmatprep.subr.bf16.mxu0 0
        %424 = vmatpush2.bf16.msra.mxu0 0
        %425 = vmatprep.subr.bf16.mxu0 0
        %426 = vmatpush2.bf16.msra.mxu0 0
        %427 = vmatprep.subr.bf16.mxu0 0
        %428 = vmatpush2.bf16.msra.mxu0 0
        %429 = vmatprep.subr.bf16.mxu0 0
        %430 = vmatpush2.bf16.msra.mxu0 0
        %431 = vmatprep.subr.bf16.mxu0 0
        %432 = vmatpush2.bf16.msra.mxu0 0
        %433 = vmatprep.subr.bf16.mxu0 0
        %434 = vmatpush2.bf16.msra.mxu0 0
        %435 = vmatprep.subr.bf16.mxu0 0
        %436 = vmatpush2.bf16.msra.mxu0 0
        %437 = vmatprep.subr.bf16.mxu0 0
        %438 = vmatpush2.bf16.msra.mxu0 0
        %439 = vmatprep.mubr.bf16.mxu0 0
        %440 = vmatmul.mubr.bf16.gmra.mxu0 %v401
        %v441 = vpop.f32.mrf.mxu0
        %v442 = vadd.f32 0.0, %v441
        %v443 = vpop.f32.mrf.mxu0
        %v444 = vpop.f32.mrf.mxu0
        %v445 = vpop.f32.mrf.mxu0
        %446 = vdwg.mxu0
        %v447 = vrcp.pop %v397
        %v448 = vmul.f32 %v442, %v447
        %449 = vst [vmem:[%s200] sm:$0xff] %v448
        %s450 = sand.u32 %s97, 1
        %s451 = scalar_lea.sflag [#allocation4], %s450
        %s452 = sand.u32 %s97, 1
        %s453 = smul.addr %s452, 8
        %s454 = scalar_lea.vmem [#allocation7], %s453
        // Predicated region
        $region41: #{tpu_custom_call.1} parent=31 // pred_check
          %p455 = pneg %p107
        $region42: #{tpu_custom_call.1} parent=31 // pred_check_branch
          %457 = sbr.rel (%p455) target = $region44
        $region43: #{tpu_custom_call.1} parent=31 // pred_region
          %s459 = ssub.s32 128, 128
          %460 = vsyncadd %s451, %s459
          %s461 = smul.addr %s21, 128
          %s462 = scalar_lea.hbm %s3, %s461
          %s464 = sshll.u32 %s454, 4
          %s465 = int_to_ptr.vmem [resolvable:$true] %s464
          %467 = dma.vmem_to_hbm [thread:$0]  %s465, 128, %s462, %s451
        $region44: #{tpu_custom_call.1} parent=31 // pred_fallthru
          _
      $region32: #{tpu_custom_call.1} parent=5 // pred_fallthru
        _
      %p468 = scmp.le.s32.totalorder 2, %s16
      // Predicated region
      $region45: #{tpu_custom_call.1} parent=5 // pred_check
        %p469 = pneg %p468
      $region46: #{tpu_custom_call.1} parent=5 // pred_check_branch
        %471 = sbr.rel (%p469) target = $region48
      $region47: #{tpu_custom_call.1} parent=5 // pred_region
        %s472 = ssub.s32 %s16, 2
        // Predicated region
        $region49: #{tpu_custom_call.1} parent=47 // pred_check
          %p473 = pneg %p113
        $region50: #{tpu_custom_call.1} parent=47 // pred_check_branch
          %475 = sbr.rel (%p473) target = $region52
        $region51: #{tpu_custom_call.1} parent=47 // pred_region
          %s476 = sand.u32 %s98, 1
          %s477 = scalar_lea.sflag [#allocation4], %s476
          %s478 = sand.u32 %s98, 1
          %s479 = smul.addr %s478, 8
          %s480 = scalar_lea.vmem [#allocation7], %s479
          %481 = dma.done %s477, 128
        $region52: #{tpu_custom_call.1} parent=47 // pred_fallthru
          _
      $region48: #{tpu_custom_call.1} parent=5 // pred_fallthru
        _
    $region6: #{tpu_custom_call.1} parent=1 // loop_footer
      %s20 = sadd.s32 1, %s16
    $region7: #{tpu_custom_call.1} parent=1 // loop_footer_branch
      %15 = sbr.rel target = $region3
    $region8: #{tpu_custom_call.1} parent=1 // loop_exit
      _
    %482 = vsyncpa [#allocation3], 1
    %s483 = scalar_lea.sflag [#allocation3], 1
    %484 = vsyncpa %s483, 1
    %485 = vsyncpa [#allocation6], 1
    %486 = vsyncpa [#allocation4], 1
    %s487 = scalar_lea.sflag [#allocation4], 1
    %488 = vsyncpa %s487, 1

</llo_original>
